<compile_context>
chip_gen: v7x
topology: tpu7x:2x2x1
jax: 0.10.0
libtpu: 0.0.40
codegen_flags: <defaults>
</compile_context>

<pallas_src>
import jax
import jax.numpy as jnp
from jax.experimental import pallas as pl
from jax.experimental.pallas import tpu as pltpu

N_PARAMS = 16  # 9 real params (4 + 2 + 2 + 1) padded to a power of two for SMEM


def xornet_kernel(p_ref, x_ref, o_ref):
    # p_ref: (16,) f32 in SMEM, packed as
    #        [W1_00, W1_01, W1_10, W1_11, b1_0, b1_1, W2_00, W2_01, b2_0, 0, ...]
    # x_ref: (B, 2) f32 in VMEM (full-array block, no padding).
    # o_ref: (B, 1) f32 in VMEM (full-array block).
    x0 = x_ref[:, 0:1]                               # (B, 1)
    x1 = x_ref[:, 1:2]                               # (B, 1)

    # Hidden layer (torch Linear: h_j = W1[j,0]*x0 + W1[j,1]*x1 + b1[j]) -> sigmoid.
    # Scalar * vector broadcasts on the VPU; sigmoid runs on the EUP.
    h0 = jax.nn.sigmoid(p_ref[0] * x0 + p_ref[1] * x1 + p_ref[4])
    h1 = jax.nn.sigmoid(p_ref[2] * x0 + p_ref[3] * x1 + p_ref[5])

    # Output layer: y = sigmoid(W2[0,0]*h0 + W2[0,1]*h1 + b2[0]).
    o_ref[...] = jax.nn.sigmoid(p_ref[6] * h0 + p_ref[7] * h1 + p_ref[8])


def pack_params(w1, b1, w2, b2):
    """Pack torch-layout params (w1 (2,2) out-in, b1 (2,), w2 (1,2), b2 (1,)) into a
    single (16,) f32 buffer. Call ONCE at init — keep it out of the per-forward path."""
    flat = jnp.concatenate([
        jnp.asarray(w1, jnp.float32).reshape(-1),    # [W1_00, W1_01, W1_10, W1_11]
        jnp.asarray(b1, jnp.float32).reshape(-1),    # [b1_0, b1_1]
        jnp.asarray(w2, jnp.float32).reshape(-1),    # [W2_00, W2_01]
        jnp.asarray(b2, jnp.float32).reshape(-1),    # [b2_0]
    ])
    return jnp.zeros((N_PARAMS,), jnp.float32).at[: flat.shape[0]].set(flat)


@jax.jit
def xornet_forward(x, params):
    """x: (B, 2) float32. params: (16,) from pack_params().
    Returns (B, 1) float32, same semantics as XORNet.forward."""
    B, F = x.shape
    assert F == 2
    x = x.astype(jnp.float32)

    return pl.pallas_call(
        xornet_kernel,
        out_shape=jax.ShapeDtypeStruct((B, 1), jnp.float32),
        in_specs=[
            pl.BlockSpec(memory_space=pltpu.MemorySpace.SMEM),   # packed scalar params
            pl.BlockSpec((B, F), lambda: (0, 0)),                # x: full-array block in VMEM
        ],
        out_specs=pl.BlockSpec((B, 1), lambda: (0, 0)),          # (B,1) output, no slice needed
    )(params, x)


def xornet_reference(x, w1, b1, w2, b2):
    h = jax.nn.sigmoid(x @ w1.T + b1)
    return jax.nn.sigmoid(h @ w2.T + b2)


if __name__ == "__main__":
    key = jax.random.PRNGKey(0)
    kx, k1, k2, k3, k4 = jax.random.split(key, 5)

    # Classic XOR truth table as input: batch = 4, features = 2.
    x = jnp.array([[0.0, 0.0], [0.0, 1.0], [1.0, 0.0], [1.0, 1.0]], dtype=jnp.float32)

    # Deterministic parameter init (torch-Linear shapes: weight (out, in), bias (out,)).
    w1 = jax.random.uniform(k1, (2, 2), jnp.float32, minval=-0.7, maxval=0.7)
    b1 = jax.random.uniform(k2, (2,), jnp.float32, minval=-0.7, maxval=0.7)
    w2 = jax.random.uniform(k3, (1, 2), jnp.float32, minval=-0.7, maxval=0.7)
    b2 = jax.random.uniform(k4, (1,), jnp.float32, minval=-0.7, maxval=0.7)

    params = pack_params(w1, b1, w2, b2)   # one-time packing, outside the hot path

    out = xornet_forward(x, params)
    out = jax.block_until_ready(out)

    ref = xornet_reference(x, w1, b1, w2, b2)
    assert out.shape == (4, 1)
    assert jnp.allclose(out, ref, atol=1e-5, rtol=1e-5), (out, ref)

    print("KERNEL_OK")
</pallas_src>

<mosaic_0001>
module attributes {stable_mosaic.version = 11 : i64} {
  func.func @xornet_kernel(%arg0: memref<16xf32, #tpu.memory_space<smem>>, %arg1: memref<4x2xf32, #tpu.memory_space<vmem>>, %arg2: memref<4x1xf32, #tpu.memory_space<vmem>>) attributes {dimension_semantics = [], scalar_prefetch = 0 : i64, scratch_operands = 0 : i64, tpu.core_type = #tpu.core_type<tc>} {
    %c0 = arith.constant 0 : index
    %c0_0 = arith.constant 0 : index
    %0 = vector.load %arg1[%c0, %c0_0] : memref<4x2xf32, #tpu.memory_space<vmem>>, vector<4x1xf32>
    %c0_1 = arith.constant 0 : index
    %c1 = arith.constant 1 : index
    %1 = vector.load %arg1[%c0_1, %c1] : memref<4x2xf32, #tpu.memory_space<vmem>>, vector<4x1xf32>
    %c0_2 = arith.constant 0 : index
    %2 = memref.load %arg0[%c0_2] : memref<16xf32, #tpu.memory_space<smem>>
    %3 = vector.broadcast %2 : f32 to vector<4x1xf32>
    %4 = arith.mulf %3, %0 : vector<4x1xf32>
    %c1_3 = arith.constant 1 : index
    %5 = memref.load %arg0[%c1_3] : memref<16xf32, #tpu.memory_space<smem>>
    %6 = vector.broadcast %5 : f32 to vector<4x1xf32>
    %7 = arith.mulf %6, %1 : vector<4x1xf32>
    %8 = arith.addf %4, %7 : vector<4x1xf32>
    %c4 = arith.constant 4 : index
    %9 = memref.load %arg0[%c4] : memref<16xf32, #tpu.memory_space<smem>>
    %10 = vector.broadcast %9 : f32 to vector<4x1xf32>
    %11 = arith.addf %8, %10 : vector<4x1xf32>
    %12 = arith.negf %11 : vector<4x1xf32>
    %13 = math.exp %12 : vector<4x1xf32>
    %cst = arith.constant 1.000000e+00 : f32
    %14 = vector.broadcast %cst : f32 to vector<4x1xf32>
    %15 = arith.addf %14, %13 : vector<4x1xf32>
    %16 = arith.divf %14, %15 : vector<4x1xf32>
    %c2 = arith.constant 2 : index
    %17 = memref.load %arg0[%c2] : memref<16xf32, #tpu.memory_space<smem>>
    %18 = vector.broadcast %17 : f32 to vector<4x1xf32>
    %19 = arith.mulf %18, %0 : vector<4x1xf32>
    %c3 = arith.constant 3 : index
    %20 = memref.load %arg0[%c3] : memref<16xf32, #tpu.memory_space<smem>>
    %21 = vector.broadcast %20 : f32 to vector<4x1xf32>
    %22 = arith.mulf %21, %1 : vector<4x1xf32>
    %23 = arith.addf %19, %22 : vector<4x1xf32>
    %c5 = arith.constant 5 : index
    %24 = memref.load %arg0[%c5] : memref<16xf32, #tpu.memory_space<smem>>
    %25 = vector.broadcast %24 : f32 to vector<4x1xf32>
    %26 = arith.addf %23, %25 : vector<4x1xf32>
    %27 = arith.negf %26 : vector<4x1xf32>
    %28 = math.exp %27 : vector<4x1xf32>
    %cst_4 = arith.constant 1.000000e+00 : f32
    %29 = vector.broadcast %cst_4 : f32 to vector<4x1xf32>
    %30 = arith.addf %29, %28 : vector<4x1xf32>
    %31 = arith.divf %29, %30 : vector<4x1xf32>
    %c6 = arith.constant 6 : index
    %32 = memref.load %arg0[%c6] : memref<16xf32, #tpu.memory_space<smem>>
    %33 = vector.broadcast %32 : f32 to vector<4x1xf32>
    %34 = arith.mulf %33, %16 : vector<4x1xf32>
    %c7 = arith.constant 7 : index
    %35 = memref.load %arg0[%c7] : memref<16xf32, #tpu.memory_space<smem>>
    %36 = vector.broadcast %35 : f32 to vector<4x1xf32>
    %37 = arith.mulf %36, %31 : vector<4x1xf32>
    %38 = arith.addf %34, %37 : vector<4x1xf32>
    %c8 = arith.constant 8 : index
    %39 = memref.load %arg0[%c8] : memref<16xf32, #tpu.memory_space<smem>>
    %40 = vector.broadcast %39 : f32 to vector<4x1xf32>
    %41 = arith.addf %38, %40 : vector<4x1xf32>
    %42 = arith.negf %41 : vector<4x1xf32>
    %43 = math.exp %42 : vector<4x1xf32>
    %cst_5 = arith.constant 1.000000e+00 : f32
    %44 = vector.broadcast %cst_5 : f32 to vector<4x1xf32>
    %45 = arith.addf %44, %43 : vector<4x1xf32>
    %46 = arith.divf %44, %45 : vector<4x1xf32>
    %c0_6 = arith.constant 0 : index
    %c0_7 = arith.constant 0 : index
    %47 = vector.load %arg2[%c0_6, %c0_7] : memref<4x1xf32, #tpu.memory_space<vmem>>, vector<4x1xf32>
    tpu.vector_store %arg2[%c0_6, %c0_7], %46 {strides = array<i32>} : memref<4x1xf32, #tpu.memory_space<vmem>>, vector<4x1xf32>,
    return
  }
}

</mosaic_0001>

<llo_original>
// kernel: xornet_forward.1
$region0: #{xornet_forward.1}
  #allocation0 [shape = 'u32[]', space=smem, size = 0x4, offset = 0x4, fixed_abs, tag = 'smem constant byte address 0x4 - core index']
  #allocation1 [shape = 'u32[144,128]{1,0:T(1,128)}', space=vmem, size = 0x12000, scoped, tag = 'internal scratch']
  %s0 = inlined_call_operand.vmem [shape: f32[16], index: 0, kind: input, shape index: {}]
  %s1 = inlined_call_operand.vmem [shape: f32[4,2], index: 1, kind: input, shape index: {}]
  %s2 = inlined_call_operand.vmem [shape: f32[4,1], index: 2, kind: output, shape index: {}]
  %s3 = sld [smem:[#allocation0]]
  $region22: #{xornet_forward.1} parent=0
    _
  %s5 = ssub.s32 1, %s3
  %s6 = scalar_select 0, %s5, %s3
  $region1: #{xornet_forward.1} parent=0
    #allocation2 [shape = 'u8[512]{0}', space=smem, size = 0x200, scoped, tag = 'input window, operand 0, single buffered']
    #allocation3 [shape = 's32[1]{0}', space=sflag, size = 0x4, scoped, tag = 'scoped memory for xornet_forward.1']
    %7 = vsyncpa [#allocation3], 0
    // Predicated region
    $region2: #{xornet_forward.1} parent=1 // pred_check
      _
    $region3: #{xornet_forward.1} parent=1 // pred_check_branch
      %9 = sbr.rel (0) target = $region5
    $region4: #{xornet_forward.1} parent=1 // pred_region
      %s11 = ssub.s32 16, 16
      %12 = vsyncadd [#allocation3], %s11
      %s14 = sshll.u32 %s0, 4
      %s15 = int_to_ptr.vmem [resolvable:$true] %s14
      %17 = dma.vmem_to_smem %s15, 16, [#allocation2], [#allocation3]
    $region5: #{xornet_forward.1} parent=1 // pred_fallthru
      _
    // Predicated region
    $region6: #{xornet_forward.1} parent=1 // pred_check
      _
    $region7: #{xornet_forward.1} parent=1 // pred_check_branch
      %19 = sbr.rel (0) target = $region9
    $region8: #{xornet_forward.1} parent=1 // pred_region
      _
    $region9: #{xornet_forward.1} parent=1 // pred_fallthru
      _
    // Predicated region
    $region10: #{xornet_forward.1} parent=1 // pred_check
      _
    $region11: #{xornet_forward.1} parent=1 // pred_check_branch
      %21 = sbr.rel (0) target = $region13
    $region12: #{xornet_forward.1} parent=1 // pred_region
      %22 = dma.done [#allocation3], 16
    $region13: #{xornet_forward.1} parent=1 // pred_fallthru
      _
    %23 = sfence
    %v24 = vld [vmem:[%s1] sm:$0xf]
    %s25 = sld [smem:[#allocation2]]
    %v26 = vstv %s25
    %v27 = vmul.f32 %v26, %v24
    %s28 = sld [smem:[#allocation2 + $0x1]]
    %v29 = vstv %s28
    %v30 = vmul.f32 %v29, %v24
    %32 = vrot.lane.b32.xlu0 %v30, 127
    %v33 = vpop.permute.xlu0 %32
    %v35 = vadd.f32 %v27, %v33
    %s36 = sld [smem:[#allocation2 + $0x4]]
    %v37 = vstv %s36
    %v38 = vadd.f32 %v35, %v37
    %v39 = vxor.u32 %v38, 2147483648
    %v40 = vmul.f32 %v39, 1.442695
    %v41 = vpow.pop %v40
    %v42 = vadd.f32 %v41, 1.0
    %v43 = vrcp.pop %v42
    %v44 = vmul.f32 1.0, %v43
    %s45 = sld [smem:[#allocation2 + $0x2]]
    %v46 = vstv %s45
    %v47 = vmul.f32 %v46, %v24
    %s48 = sld [smem:[#allocation2 + $0x3]]
    %v49 = vstv %s48
    %v50 = vmul.f32 %v49, %v24
    %52 = vrot.lane.b32.xlu0 %v50, 127
    %v53 = vpop.permute.xlu0 %52
    %v55 = vadd.f32 %v47, %v53
    %s56 = sld [smem:[#allocation2 + $0x5]]
    %v57 = vstv %s56
    %v58 = vadd.f32 %v55, %v57
    %v59 = vxor.u32 %v58, 2147483648
    %v60 = vmul.f32 %v59, 1.442695
    %v61 = vpow.pop %v60
    %v62 = vadd.f32 %v61, 1.0
    %v63 = vrcp.pop %v62
    %v64 = vmul.f32 1.0, %v63
    %s65 = sld [smem:[#allocation2 + $0x6]]
    %v66 = vstv %s65
    %v67 = vmul.f32 %v66, %v44
    %s68 = sld [smem:[#allocation2 + $0x7]]
    %v69 = vstv %s68
    %v70 = vmul.f32 %v69, %v64
    %v71 = vadd.f32 %v67, %v70
    %s72 = sld [smem:[#allocation2 + $0x8]]
    %v73 = vstv %s72
    %v74 = vadd.f32 %v71, %v73
    %v75 = vxor.u32 %v74, 2147483648
    %v76 = vmul.f32 %v75, 1.442695
    %v77 = vpow.pop %v76
    %v78 = vadd.f32 %v77, 1.0
    %v79 = vrcp.pop %v78
    %v80 = vmul.f32 1.0, %v79
    %vm81 = vcmask 3072
    %82 = vst.msk [vmem:[%s2] sm:$0xf] %vm81, %v80
    // Predicated region
    $region14: #{xornet_forward.1} parent=1 // pred_check
      _
    $region15: #{xornet_forward.1} parent=1 // pred_check_branch
      %84 = sbr.rel (0) target = $region17
    $region16: #{xornet_forward.1} parent=1 // pred_region
      _
    $region17: #{xornet_forward.1} parent=1 // pred_fallthru
      _
    // Predicated region
    $region18: #{xornet_forward.1} parent=1 // pred_check
      _
    $region19: #{xornet_forward.1} parent=1 // pred_check_branch
      %86 = sbr.rel (0) target = $region21
    $region20: #{xornet_forward.1} parent=1 // pred_region
      _
    $region21: #{xornet_forward.1} parent=1 // pred_fallthru
      _
    %87 = vsyncpa [#allocation3], 1

</llo_original>
